<compile_context>
chip_gen: v7x
topology: tpu7x:2x2x1
jax: 0.10.0
libtpu: 0.0.40
codegen_flags: <defaults>
</compile_context>

<pallas_src>
import functools

import numpy as np
import jax
import jax.numpy as jnp
from jax import lax
from jax.experimental import pallas as pl
from jax.experimental.pallas import tpu as pltpu


def _roi_pool_kernel(bidx_ref, hs_ref, he_ref, ws_ref, we_ref,   # scalar prefetch (SMEM)
                     feat_ref, out_ref, *, ph_out, pw_out):
    """One grid step = one (channel-block, ROI) pair.

    feat_ref : (1, H, W, Cb) VMEM tile of the feature map for this ROI's image
    hs/he    : (K*PH,) int32 SMEM -- per-ROI bin row start/end (clipped)
    ws/we    : (K*PW,) int32 SMEM -- per-ROI bin col start/end (clipped)
    out_ref  : (1, PH*PW, Cb) VMEM output tile
    """
    k = pl.program_id(1)                                   # ROI index (inner grid axis)
    _, H, W, Cb = feat_ref.shape
    feat = feat_ref[0]                                     # (H, W, Cb)
    neg = jnp.array(-jnp.inf, dtype=feat.dtype)            # dtype-safe fill

    # ---- stage 1: per-pw column reduction over W -> PW tiles of (H, Cb) ----
    w_iota = lax.broadcasted_iota(jnp.int32, (1, W, 1), 1)
    col_max = []
    for pw in range(pw_out):
        wstart = ws_ref[k * pw_out + pw]
        wend = we_ref[k * pw_out + pw]
        wmask = (w_iota >= wstart) & (w_iota < wend)       # (1, W, 1) -> broadcast
        col_max.append(jnp.max(jnp.where(wmask, feat, neg), axis=1))    # (H, Cb)

    # ---- stage 2: per-ph row reduction over H -> (PH*PW, Cb), single store ----
    h_iota = lax.broadcasted_iota(jnp.int32, (H, 1), 0)
    rows = []
    for ph in range(ph_out):
        hstart = hs_ref[k * ph_out + ph]
        hend = he_ref[k * ph_out + ph]
        hmask = (h_iota >= hstart) & (h_iota < hend)       # (H, 1)
        h_empty = hend <= hstart
        for pw in range(pw_out):
            wstart = ws_ref[k * pw_out + pw]
            wend = we_ref[k * pw_out + pw]
            is_empty = jnp.logical_or(h_empty, wend <= wstart)
            r = jnp.max(jnp.where(hmask, col_max[pw], neg),
                        axis=0, keepdims=True)             # (1, Cb)
            rows.append(jnp.where(is_empty, jnp.zeros_like(r), r))  # empty bin -> 0
    out_ref[0] = jnp.concatenate(rows, axis=0).astype(out_ref.dtype)


def _pick_channel_block(C, H, W, itemsize, budget=48 << 20):
    """Largest channel block that divides C, is lane-aligned (multiple of 128)
    unless it is all of C, and keeps the double-buffered feature tile inside a
    VMEM budget safe for v5e (16 MiB default scoped) / v7x (64 MiB physical)."""
    if C <= 128 or C % 128 != 0:
        return C
    cb = C
    while cb > 128 and 2 * H * W * cb * itemsize > budget:
        half = cb // 2
        if half % 128 != 0 or C % half != 0:
            break
        cb = half
    return cb


def roi_pool_pallas(inp, rois, output_size, spatial_scale):
    """ROIPool forward.

    inp  : (N, C, H, W)  (PyTorch NCHW)
    rois : (K, 5) float32, rows = [batch_idx, x1, y1, x2, y2] in input-image coords
    returns (K, C, PH, PW), dtype of `inp`
    """
    PH, PW = output_size
    N, C, H, W = inp.shape
    K = rois.shape[0]
    out_dtype = inp.dtype

    # TODO(synk): accept NHWC features directly to avoid this full-HBM transpose round trip.
    feat = jnp.transpose(inp, (0, 2, 3, 1))                       # NHWC

    r = rois.astype(jnp.float32)
    batch_idx = r[:, 0].astype(jnp.int32)

    # round(x * spatial_scale), half-away-from-zero like C roundf()
    def _rnd(x):
        return jnp.where(x >= 0, jnp.floor(x + 0.5), jnp.ceil(x - 0.5)).astype(jnp.int32)

    rsw = _rnd(r[:, 1] * spatial_scale)
    rsh = _rnd(r[:, 2] * spatial_scale)
    rew = _rnd(r[:, 3] * spatial_scale)
    reh = _rnd(r[:, 4] * spatial_scale)
    roi_w = jnp.maximum(rew - rsw + 1, 1)
    roi_h = jnp.maximum(reh - rsh + 1, 1)
    bin_h = roi_h.astype(jnp.float32) / jnp.float32(PH)           # (K,)
    bin_w = roi_w.astype(jnp.float32) / jnp.float32(PW)

    phv = jnp.arange(PH, dtype=jnp.float32)
    pwv = jnp.arange(PW, dtype=jnp.float32)
    hstart = jnp.clip(jnp.floor(phv[None] * bin_h[:, None]).astype(jnp.int32) + rsh[:, None], 0, H)
    hend = jnp.clip(jnp.ceil((phv[None] + 1.0) * bin_h[:, None]).astype(jnp.int32) + rsh[:, None], 0, H)
    wstart = jnp.clip(jnp.floor(pwv[None] * bin_w[:, None]).astype(jnp.int32) + rsw[:, None], 0, W)
    wend = jnp.clip(jnp.ceil((pwv[None] + 1.0) * bin_w[:, None]).astype(jnp.int32) + rsw[:, None], 0, W)

    # Sort ROIs by batch index so consecutive grid steps keep the same feature
    # block index (Pallas skips the HBM->VMEM copy when it is unchanged).
    order = jnp.argsort(batch_idx)
    inv_order = jnp.argsort(order)
    batch_idx_s = batch_idx[order]
    hs = hstart[order].reshape(-1)                                # (K*PH,) 1-D SMEM tables
    he = hend[order].reshape(-1)
    ws = wstart[order].reshape(-1)
    we = wend[order].reshape(-1)

    cb = _pick_channel_block(C, H, W, feat.dtype.itemsize)
    num_cb = C // cb

    feat_bytes = H * W * cb * feat.dtype.itemsize
    out_bytes = PH * PW * cb * jnp.dtype(out_dtype).itemsize
    vmem_limit = int(min(max(2 * feat_bytes + 2 * out_bytes + (2 << 20), 16 << 20), 64 << 20))

    kernel = functools.partial(_roi_pool_kernel, ph_out=PH, pw_out=PW)

    out_sorted = pl.pallas_call(
        kernel,
        out_shape=jax.ShapeDtypeStruct((K, PH * PW, C), out_dtype),
        grid_spec=pltpu.PrefetchScalarGridSpec(
            num_scalar_prefetch=5,                 # batch_idx, hstart, hend, wstart, wend
            grid=(num_cb, K),                      # channel blocks outer, ROIs inner
            in_specs=[
                # data-dependent batch selection via scalar prefetch
                pl.BlockSpec((1, H, W, cb),
                             lambda c, k, bidx, hs, he, ws, we: (bidx[k], 0, 0, c)),
            ],
            out_specs=pl.BlockSpec((1, PH * PW, cb),
                                   lambda c, k, bidx, hs, he, ws, we: (k, 0, c)),
        ),
        compiler_params=pltpu.CompilerParams(
            dimension_semantics=("parallel", "parallel"),
            vmem_limit_bytes=vmem_limit),
    )(batch_idx_s, hs, he, ws, we, feat)

    out = out_sorted[inv_order]                                   # undo ROI sort
    return out.reshape(K, PH, PW, C).transpose(0, 3, 1, 2)        # (K, C, PH, PW)


class ROIPool:
    """Drop-in analogue of maskrcnn_utils.ROIPool (forward only)."""

    def __init__(self, output_size, spatial_scale):
        if isinstance(output_size, int):
            output_size = (output_size, output_size)
        self.output_size = tuple(output_size)
        self.spatial_scale = float(spatial_scale)

    def __call__(self, input, rois):
        return roi_pool_pallas(input, rois, self.output_size, self.spatial_scale)

    def __repr__(self):
        return (self.__class__.__name__ + "(output_size=" + str(self.output_size)
                + ", spatial_scale=" + str(self.spatial_scale) + ")")


def _roi_pool_ref(inp, rois, output_size, spatial_scale):
    """Pure numpy reference mirroring the CUDA roi_pool_forward semantics."""
    inp = np.asarray(inp, dtype=np.float32)
    rois = np.asarray(rois, dtype=np.float32)
    PH, PW = output_size
    _, C, H, W = inp.shape
    K = rois.shape[0]
    out = np.zeros((K, C, PH, PW), dtype=np.float32)

    def rnd(x):
        return int(np.floor(x + 0.5)) if x >= 0 else int(np.ceil(x - 0.5))

    for k in range(K):
        b = int(rois[k, 0])
        rsw = rnd(rois[k, 1] * spatial_scale)
        rsh = rnd(rois[k, 2] * spatial_scale)
        rew = rnd(rois[k, 3] * spatial_scale)
        reh = rnd(rois[k, 4] * spatial_scale)
        roi_w = max(rew - rsw + 1, 1)
        roi_h = max(reh - rsh + 1, 1)
        bin_h = np.float32(roi_h) / np.float32(PH)
        bin_w = np.float32(roi_w) / np.float32(PW)
        for ph in range(PH):
            hstart = min(max(int(np.floor(np.float32(ph) * bin_h)) + rsh, 0), H)
            hend = min(max(int(np.ceil(np.float32(ph + 1) * bin_h)) + rsh, 0), H)
            for pw in range(PW):
                wstart = min(max(int(np.floor(np.float32(pw) * bin_w)) + rsw, 0), W)
                wend = min(max(int(np.ceil(np.float32(pw + 1) * bin_w)) + rsw, 0), W)
                if hend <= hstart or wend <= wstart:
                    out[k, :, ph, pw] = 0.0
                else:
                    out[k, :, ph, pw] = inp[b, :, hstart:hend, wstart:wend].max(axis=(1, 2))
    return out


if __name__ == "__main__":
    key = jax.random.PRNGKey(0)
    N, C, H, W = 2, 32, 16, 16
    K = 5
    output_size = (2, 2)
    spatial_scale = 0.5   # rois are in input-image coords (image = feature / spatial_scale)

    k1, k2 = jax.random.split(key)
    x = jax.random.normal(k1, (N, C, H, W), dtype=jnp.float32)

    # interleaved batch indices to exercise the sort + inverse permutation path
    bidx = jnp.array([1, 0, 1, 0, 0], dtype=jnp.float32)
    coords = jax.random.uniform(k2, (K, 4), minval=0.0,
                                maxval=(W / spatial_scale) - 1.0, dtype=jnp.float32)
    x1 = jnp.minimum(coords[:, 0], coords[:, 2])
    x2 = jnp.maximum(coords[:, 0], coords[:, 2])
    y1 = jnp.minimum(coords[:, 1], coords[:, 3])
    y2 = jnp.maximum(coords[:, 1], coords[:, 3])
    rois = jnp.stack([bidx, x1, y1, x2, y2], axis=1)

    pool = ROIPool(output_size, spatial_scale)
    out = jax.block_until_ready(pool(x, rois))

    assert out.shape == (K, C, output_size[0], output_size[1])
    ref = _roi_pool_ref(np.asarray(x), np.asarray(rois), output_size, spatial_scale)
    np.testing.assert_allclose(np.asarray(out), ref, rtol=1e-5, atol=1e-5)
    print("KERNEL_OK")
</pallas_src>

<mosaic_0001>
module attributes {stable_mosaic.version = 11 : i64} {
  func.func @_roi_pool_kernel(%arg0: i32, %arg1: i32, %arg2: memref<5xi32, #tpu.memory_space<smem>>, %arg3: memref<10xi32, #tpu.memory_space<smem>>, %arg4: memref<10xi32, #tpu.memory_space<smem>>, %arg5: memref<10xi32, #tpu.memory_space<smem>>, %arg6: memref<10xi32, #tpu.memory_space<smem>>, %arg7: memref<1x16x16x32xf32, #tpu.memory_space<vmem>>, %arg8: memref<1x4x32xf32, #tpu.memory_space<vmem>>) attributes {dimension_semantics = [#tpu.dimension_semantics<parallel>, #tpu.dimension_semantics<parallel>], iteration_bounds = array<i64: 1, 5>, scalar_prefetch = 5 : i64, scratch_operands = 0 : i64, tpu.core_type = #tpu.core_type<tc>, window_params = [{transform_indices = @transform_0, window_bounds = array<i64: 1, 16, 16, 32>}, {transform_indices = @transform_1, window_bounds = array<i64: 1, 4, 32>}]} {
    %c0 = arith.constant 0 : index
    %c0_0 = arith.constant 0 : index
    %c0_1 = arith.constant 0 : index
    %c0_2 = arith.constant 0 : index
    %0 = vector.load %arg7[%c0, %c0_0, %c0_1, %c0_2] : memref<1x16x16x32xf32, #tpu.memory_space<vmem>>, vector<1x16x16x32xf32>
    %1 = vector.shape_cast %0 : vector<1x16x16x32xf32> to vector<16x16x32xf32>
    %2 = tpu.iota {dimensions = array<i32: 1>} : vector<1x16x1xi32>
    %c2_i32 = arith.constant 2 : i32
    %3 = arith.muli %arg1, %c2_i32 : i32
    %c0_i32 = arith.constant 0 : i32
    %4 = arith.addi %3, %c0_i32 : i32
    %5 = arith.index_cast %4 : i32 to index
    %6 = memref.load %arg5[%5] : memref<10xi32, #tpu.memory_space<smem>>
    %c2_i32_3 = arith.constant 2 : i32
    %7 = arith.muli %arg1, %c2_i32_3 : i32
    %c0_i32_4 = arith.constant 0 : i32
    %8 = arith.addi %7, %c0_i32_4 : i32
    %9 = arith.index_cast %8 : i32 to index
    %10 = memref.load %arg6[%9] : memref<10xi32, #tpu.memory_space<smem>>
    %11 = vector.broadcast %6 : i32 to vector<1x16x1xi32>
    %12 = arith.cmpi sge, %2, %11 : vector<1x16x1xi32>
    %13 = vector.broadcast %10 : i32 to vector<1x16x1xi32>
    %14 = arith.cmpi slt, %2, %13 : vector<1x16x1xi32>
    %15 = arith.andi %12, %14 : vector<1x16x1xi1>
    %cst = arith.constant 0xFF800000 : f32
    %16 = vector.shape_cast %15 : vector<1x16x1xi1> to vector<1x16x1xi1>
    %17 = vector.broadcast %16 : vector<1x16x1xi1> to vector<16x16x32xi1>
    %18 = vector.broadcast %cst : f32 to vector<16x16x32xf32>
    %19 = arith.select %17, %1, %18 : vector<16x16x32xi1>, vector<16x16x32xf32>
    %cst_5 = arith.constant dense<0xFF800000> : vector<16x32xf32>
    %20 = vector.multi_reduction <maximumf>, %19, %cst_5 [1] : vector<16x16x32xf32> to vector<16x32xf32>
    %c2_i32_6 = arith.constant 2 : i32
    %21 = arith.muli %arg1, %c2_i32_6 : i32
    %c1_i32 = arith.constant 1 : i32
    %22 = arith.addi %21, %c1_i32 : i32
    %23 = arith.index_cast %22 : i32 to index
    %24 = memref.load %arg5[%23] : memref<10xi32, #tpu.memory_space<smem>>
    %c2_i32_7 = arith.constant 2 : i32
    %25 = arith.muli %arg1, %c2_i32_7 : i32
    %c1_i32_8 = arith.constant 1 : i32
    %26 = arith.addi %25, %c1_i32_8 : i32
    %27 = arith.index_cast %26 : i32 to index
    %28 = memref.load %arg6[%27] : memref<10xi32, #tpu.memory_space<smem>>
    %29 = vector.broadcast %24 : i32 to vector<1x16x1xi32>
    %30 = arith.cmpi sge, %2, %29 : vector<1x16x1xi32>
    %31 = vector.broadcast %28 : i32 to vector<1x16x1xi32>
    %32 = arith.cmpi slt, %2, %31 : vector<1x16x1xi32>
    %33 = arith.andi %30, %32 : vector<1x16x1xi1>
    %cst_9 = arith.constant 0xFF800000 : f32
    %34 = vector.shape_cast %33 : vector<1x16x1xi1> to vector<1x16x1xi1>
    %35 = vector.broadcast %34 : vector<1x16x1xi1> to vector<16x16x32xi1>
    %36 = vector.broadcast %cst_9 : f32 to vector<16x16x32xf32>
    %37 = arith.select %35, %1, %36 : vector<16x16x32xi1>, vector<16x16x32xf32>
    %cst_10 = arith.constant dense<0xFF800000> : vector<16x32xf32>
    %38 = vector.multi_reduction <maximumf>, %37, %cst_10 [1] : vector<16x16x32xf32> to vector<16x32xf32>
    %39 = tpu.iota {dimensions = array<i32: 0>} : vector<16x1xi32>
    %c2_i32_11 = arith.constant 2 : i32
    %40 = arith.muli %arg1, %c2_i32_11 : i32
    %c0_i32_12 = arith.constant 0 : i32
    %41 = arith.addi %40, %c0_i32_12 : i32
    %42 = arith.index_cast %41 : i32 to index
    %43 = memref.load %arg3[%42] : memref<10xi32, #tpu.memory_space<smem>>
    %c2_i32_13 = arith.constant 2 : i32
    %44 = arith.muli %arg1, %c2_i32_13 : i32
    %c0_i32_14 = arith.constant 0 : i32
    %45 = arith.addi %44, %c0_i32_14 : i32
    %46 = arith.index_cast %45 : i32 to index
    %47 = memref.load %arg4[%46] : memref<10xi32, #tpu.memory_space<smem>>
    %48 = vector.broadcast %43 : i32 to vector<16x1xi32>
    %49 = arith.cmpi sge, %39, %48 : vector<16x1xi32>
    %50 = vector.broadcast %47 : i32 to vector<16x1xi32>
    %51 = arith.cmpi slt, %39, %50 : vector<16x1xi32>
    %52 = arith.andi %49, %51 : vector<16x1xi1>
    %53 = arith.cmpi sle, %47, %43 : i32
    %c2_i32_15 = arith.constant 2 : i32
    %54 = arith.muli %arg1, %c2_i32_15 : i32
    %c0_i32_16 = arith.constant 0 : i32
    %55 = arith.addi %54, %c0_i32_16 : i32
    %56 = arith.index_cast %55 : i32 to index
    %57 = memref.load %arg5[%56] : memref<10xi32, #tpu.memory_space<smem>>
    %c2_i32_17 = arith.constant 2 : i32
    %58 = arith.muli %arg1, %c2_i32_17 : i32
    %c0_i32_18 = arith.constant 0 : i32
    %59 = arith.addi %58, %c0_i32_18 : i32
    %60 = arith.index_cast %59 : i32 to index
    %61 = memref.load %arg6[%60] : memref<10xi32, #tpu.memory_space<smem>>
    %62 = arith.cmpi sle, %61, %57 : i32
    %63 = arith.ori %53, %62 : i1
    %cst_19 = arith.constant 0xFF800000 : f32
    %64 = vector.shape_cast %52 : vector<16x1xi1> to vector<16x1xi1>
    %65 = vector.broadcast %64 : vector<16x1xi1> to vector<16x32xi1>
    %66 = vector.broadcast %cst_19 : f32 to vector<16x32xf32>
    %67 = arith.select %65, %20, %66 : vector<16x32xi1>, vector<16x32xf32>
    %cst_20 = arith.constant dense<0xFF800000> : vector<32xf32>
    %68 = vector.multi_reduction <maximumf>, %67, %cst_20 [0] : vector<16x32xf32> to vector<32xf32>
    %69 = vector.shape_cast %68 : vector<32xf32> to vector<1x32xf32>
    %cst_21 = arith.constant 0.000000e+00 : f32
    %70 = vector.broadcast %cst_21 : f32 to vector<1x32xf32>
    %71 = arith.select %63, %70, %69 : vector<1x32xf32>
    %c2_i32_22 = arith.constant 2 : i32
    %72 = arith.muli %arg1, %c2_i32_22 : i32
    %c1_i32_23 = arith.constant 1 : i32
    %73 = arith.addi %72, %c1_i32_23 : i32
    %74 = arith.index_cast %73 : i32 to index
    %75 = memref.load %arg5[%74] : memref<10xi32, #tpu.memory_space<smem>>
    %c2_i32_24 = arith.constant 2 : i32
    %76 = arith.muli %arg1, %c2_i32_24 : i32
    %c1_i32_25 = arith.constant 1 : i32
    %77 = arith.addi %76, %c1_i32_25 : i32
    %78 = arith.index_cast %77 : i32 to index
    %79 = memref.load %arg6[%78] : memref<10xi32, #tpu.memory_space<smem>>
    %80 = arith.cmpi sle, %79, %75 : i32
    %81 = arith.ori %53, %80 : i1
    %cst_26 = arith.constant 0xFF800000 : f32
    %82 = vector.shape_cast %52 : vector<16x1xi1> to vector<16x1xi1>
    %83 = vector.broadcast %82 : vector<16x1xi1> to vector<16x32xi1>
    %84 = vector.broadcast %cst_26 : f32 to vector<16x32xf32>
    %85 = arith.select %83, %38, %84 : vector<16x32xi1>, vector<16x32xf32>
    %cst_27 = arith.constant dense<0xFF800000> : vector<32xf32>
    %86 = vector.multi_reduction <maximumf>, %85, %cst_27 [0] : vector<16x32xf32> to vector<32xf32>
    %87 = vector.shape_cast %86 : vector<32xf32> to vector<1x32xf32>
    %cst_28 = arith.constant 0.000000e+00 : f32
    %88 = vector.broadcast %cst_28 : f32 to vector<1x32xf32>
    %89 = arith.select %81, %88, %87 : vector<1x32xf32>
    %c2_i32_29 = arith.constant 2 : i32
    %90 = arith.muli %arg1, %c2_i32_29 : i32
    %c1_i32_30 = arith.constant 1 : i32
    %91 = arith.addi %90, %c1_i32_30 : i32
    %92 = arith.index_cast %91 : i32 to index
    %93 = memref.load %arg3[%92] : memref<10xi32, #tpu.memory_space<smem>>
    %c2_i32_31 = arith.constant 2 : i32
    %94 = arith.muli %arg1, %c2_i32_31 : i32
    %c1_i32_32 = arith.constant 1 : i32
    %95 = arith.addi %94, %c1_i32_32 : i32
    %96 = arith.index_cast %95 : i32 to index
    %97 = memref.load %arg4[%96] : memref<10xi32, #tpu.memory_space<smem>>
    %98 = vector.broadcast %93 : i32 to vector<16x1xi32>
    %99 = arith.cmpi sge, %39, %98 : vector<16x1xi32>
    %100 = vector.broadcast %97 : i32 to vector<16x1xi32>
    %101 = arith.cmpi slt, %39, %100 : vector<16x1xi32>
    %102 = arith.andi %99, %101 : vector<16x1xi1>
    %103 = arith.cmpi sle, %97, %93 : i32
    %c2_i32_33 = arith.constant 2 : i32
    %104 = arith.muli %arg1, %c2_i32_33 : i32
    %c0_i32_34 = arith.constant 0 : i32
    %105 = arith.addi %104, %c0_i32_34 : i32
    %106 = arith.index_cast %105 : i32 to index
    %107 = memref.load %arg5[%106] : memref<10xi32, #tpu.memory_space<smem>>
    %c2_i32_35 = arith.constant 2 : i32
    %108 = arith.muli %arg1, %c2_i32_35 : i32
    %c0_i32_36 = arith.constant 0 : i32
    %109 = arith.addi %108, %c0_i32_36 : i32
    %110 = arith.index_cast %109 : i32 to index
    %111 = memref.load %arg6[%110] : memref<10xi32, #tpu.memory_space<smem>>
    %112 = arith.cmpi sle, %111, %107 : i32
    %113 = arith.ori %103, %112 : i1
    %cst_37 = arith.constant 0xFF800000 : f32
    %114 = vector.shape_cast %102 : vector<16x1xi1> to vector<16x1xi1>
    %115 = vector.broadcast %114 : vector<16x1xi1> to vector<16x32xi1>
    %116 = vector.broadcast %cst_37 : f32 to vector<16x32xf32>
    %117 = arith.select %115, %20, %116 : vector<16x32xi1>, vector<16x32xf32>
    %cst_38 = arith.constant dense<0xFF800000> : vector<32xf32>
    %118 = vector.multi_reduction <maximumf>, %117, %cst_38 [0] : vector<16x32xf32> to vector<32xf32>
    %119 = vector.shape_cast %118 : vector<32xf32> to vector<1x32xf32>
    %cst_39 = arith.constant 0.000000e+00 : f32
    %120 = vector.broadcast %cst_39 : f32 to vector<1x32xf32>
    %121 = arith.select %113, %120, %119 : vector<1x32xf32>
    %c2_i32_40 = arith.constant 2 : i32
    %122 = arith.muli %arg1, %c2_i32_40 : i32
    %c1_i32_41 = arith.constant 1 : i32
    %123 = arith.addi %122, %c1_i32_41 : i32
    %124 = arith.index_cast %123 : i32 to index
    %125 = memref.load %arg5[%124] : memref<10xi32, #tpu.memory_space<smem>>
    %c2_i32_42 = arith.constant 2 : i32
    %126 = arith.muli %arg1, %c2_i32_42 : i32
    %c1_i32_43 = arith.constant 1 : i32
    %127 = arith.addi %126, %c1_i32_43 : i32
    %128 = arith.index_cast %127 : i32 to index
    %129 = memref.load %arg6[%128] : memref<10xi32, #tpu.memory_space<smem>>
    %130 = arith.cmpi sle, %129, %125 : i32
    %131 = arith.ori %103, %130 : i1
    %cst_44 = arith.constant 0xFF800000 : f32
    %132 = vector.shape_cast %102 : vector<16x1xi1> to vector<16x1xi1>
    %133 = vector.broadcast %132 : vector<16x1xi1> to vector<16x32xi1>
    %134 = vector.broadcast %cst_44 : f32 to vector<16x32xf32>
    %135 = arith.select %133, %38, %134 : vector<16x32xi1>, vector<16x32xf32>
    %cst_45 = arith.constant dense<0xFF800000> : vector<32xf32>
    %136 = vector.multi_reduction <maximumf>, %135, %cst_45 [0] : vector<16x32xf32> to vector<32xf32>
    %137 = vector.shape_cast %136 : vector<32xf32> to vector<1x32xf32>
    %cst_46 = arith.constant 0.000000e+00 : f32
    %138 = vector.broadcast %cst_46 : f32 to vector<1x32xf32>
    %139 = arith.select %131, %138, %137 : vector<1x32xf32>
    %140 = tpu.concatenate %71, %89, %121, %139 in 0 : vector<1x32xf32>, vector<1x32xf32>, vector<1x32xf32>, vector<1x32xf32> -> vector<4x32xf32>
    %c0_47 = arith.constant 0 : index
    %c0_48 = arith.constant 0 : index
    %c0_49 = arith.constant 0 : index
    %141 = vector.load %arg8[%c0_47, %c0_48, %c0_49] : memref<1x4x32xf32, #tpu.memory_space<vmem>>, vector<1x4x32xf32>
    %142 = vector.shape_cast %141 : vector<1x4x32xf32> to vector<4x32xf32>
    %143 = vector.shape_cast %140 : vector<4x32xf32> to vector<1x4x32xf32>
    tpu.vector_store %arg8[%c0_47, %c0_48, %c0_49], %143 {strides = array<i32>} : memref<1x4x32xf32, #tpu.memory_space<vmem>>, vector<1x4x32xf32>,
    return
  }
  func.func @transform_0(%arg0: i32, %arg1: i32, %arg2: memref<5xi32, #tpu.memory_space<smem>>, %arg3: memref<10xi32, #tpu.memory_space<smem>>, %arg4: memref<10xi32, #tpu.memory_space<smem>>, %arg5: memref<10xi32, #tpu.memory_space<smem>>, %arg6: memref<10xi32, #tpu.memory_space<smem>>) -> (i32, i32, i32, i32) {
    %0 = arith.index_cast %arg1 : i32 to index
    %1 = memref.load %arg2[%0] : memref<5xi32, #tpu.memory_space<smem>>
    %c0_i32 = arith.constant 0 : i32
    %c0_i32_0 = arith.constant 0 : i32
    %c0_i32_1 = arith.constant 0 : i32
    return %1, %c0_i32, %c0_i32_0, %arg0 : i32, i32, i32, i32
  }
  func.func @transform_1(%arg0: i32, %arg1: i32, %arg2: memref<5xi32, #tpu.memory_space<smem>>, %arg3: memref<10xi32, #tpu.memory_space<smem>>, %arg4: memref<10xi32, #tpu.memory_space<smem>>, %arg5: memref<10xi32, #tpu.memory_space<smem>>, %arg6: memref<10xi32, #tpu.memory_space<smem>>) -> (i32, i32, i32) {
    %c0_i32 = arith.constant 0 : i32
    %c0_i32_0 = arith.constant 0 : i32
    return %arg1, %c0_i32, %arg0 : i32, i32, i32
  }
}

</mosaic_0001>

<llo_original>
// kernel: tpu_custom_call.1
$region0: #{tpu_custom_call.1}
  #allocation0 [shape = 'u32[]', space=smem, size = 0x4, offset = 0x4, fixed_abs, tag = 'smem constant byte address 0x4 - core index']
  #allocation1 [shape = 'u32[144,128]{1,0:T(1,128)}', space=vmem, size = 0x12000, scoped, tag = 'internal scratch']
  #allocation2 [shape = 's32[1]{0}', space=sflag, size = 0x4, scoped, tag = 'scoped memory for tpu_custom_call.1']
  #allocation3 [shape = 'u8[512]{0}', space=smem, size = 0x200, scoped, tag = 'prefetched SMEM operand 0']
  #allocation4 [shape = 'u8[512]{0}', space=smem, size = 0x200, scoped, tag = 'prefetched SMEM operand 1']
  #allocation5 [shape = 'u8[512]{0}', space=smem, size = 0x200, scoped, tag = 'prefetched SMEM operand 2']
  #allocation6 [shape = 'u8[512]{0}', space=smem, size = 0x200, scoped, tag = 'prefetched SMEM operand 3']
  #allocation7 [shape = 'u8[512]{0}', space=smem, size = 0x200, scoped, tag = 'prefetched SMEM operand 4']
  %s0 = inlined_call_operand.hbm [shape: s32[5], index: 0, kind: input, shape index: {}]
  %s1 = inlined_call_operand.vmem [shape: s32[10], index: 1, kind: input, shape index: {}]
  %s2 = inlined_call_operand.vmem [shape: s32[10], index: 2, kind: input, shape index: {}]
  %s3 = inlined_call_operand.vmem [shape: s32[10], index: 3, kind: input, shape index: {}]
  %s4 = inlined_call_operand.vmem [shape: s32[10], index: 4, kind: input, shape index: {}]
  %s5 = inlined_call_operand.hbm [shape: f32[2,16,16,32], index: 5, kind: input, shape index: {}]
  %s6 = inlined_call_operand.hbm [shape: f32[5,4,32], index: 6, kind: output, shape index: {}]
  %s7 = sld [smem:[#allocation0]]
  $region41: #{tpu_custom_call.1} parent=0
    _
  %s9 = ssub.s32 1, %s7
  %s10 = scalar_select 0, %s9, %s7
  %12 = dma.hbm_to_smem %s0, 16, [#allocation3], [#allocation2]
  %s13 = sshll.u32 %s1, 4
  %s14 = int_to_ptr.vmem [resolvable:$true] %s13
  %16 = dma.vmem_to_smem %s14, 16, [#allocation4], [#allocation2]
  %s17 = sshll.u32 %s2, 4
  %s18 = int_to_ptr.vmem [resolvable:$true] %s17
  %20 = dma.vmem_to_smem %s18, 16, [#allocation5], [#allocation2]
  %s21 = sshll.u32 %s3, 4
  %s22 = int_to_ptr.vmem [resolvable:$true] %s21
  %24 = dma.vmem_to_smem %s22, 16, [#allocation6], [#allocation2]
  %s25 = sshll.u32 %s4, 4
  %s26 = int_to_ptr.vmem [resolvable:$true] %s25
  %28 = dma.vmem_to_smem %s26, 16, [#allocation7], [#allocation2]
  %29 = dma.done [#allocation2], 80
  %30 = sfence
  $region1: #{tpu_custom_call.1} parent=0
    #allocation8 [shape = 'u8[262144]{0}', space=vmem, size = 0x40000, scoped, tag = 'input window, operand 5']
    #allocation9 [shape = 's32[2]{0}', space=sflag, size = 0x8, scoped, tag = 'scoped memory for tpu_custom_call.1']
    #allocation10 [shape = 's32[2]{0}', space=sflag, size = 0x8, scoped, tag = 'scoped memory for tpu_custom_call.1']
    #allocation11 [shape = 'u8[4096]{0}', space=vmem, size = 0x1000, scoped, tag = 'output window, operand 0']
    %31 = vsyncpa [#allocation9], 0
    %s32 = scalar_lea.sflag [#allocation9], 1
    %33 = vsyncpa %s32, 0
    %34 = vsyncpa [#allocation10], 0
    %s35 = scalar_lea.sflag [#allocation10], 1
    %36 = vsyncpa %s35, 0
    loop: start=0, step=1, limit=7
    $region2: #{tpu_custom_call.1} parent=1 // loop_pre_header
      _
    $region3: #{tpu_custom_call.1} parent=1 // loop_header
      %s38 = sphi 0, %s42
      %p39 = scmp.ge.s32.totalorder %s38, 7
      %s45 = sphi 0, %s57
      %s46 = sphi 0, %s53
      %s47 = sphi 0, %s45
      %s48 = sphi 0, %s46
      %s49 = sphi 0, %s47
      %s50 = sphi 0, %s48
      %s64 = sphi 0, %s66
      %s67 = sphi 0, %s64
      %s68 = sphi 0, %s67
      %s84 = sphi 0, %s68
      %s92 = sphi 0, %s94
      %s95 = sphi 0, %s92
      %s96 = sphi 0, %s95
      %s112 = sphi 0, %s96
    $region4: #{tpu_custom_call.1} parent=1 // loop_header_branch
      %41 = sbr.rel (%p39) target = $region8
    $region5: #{tpu_custom_call.1} parent=1 // loop_body
      %s43 = ssub.s32 %s38, 1
      %s44 = ssub.s32 %s38, 2
      %s51 = sadd.s32 1, %s46
      %p52 = scmp.ge.s32.totalorder %s51, 5
      %s53 = scalar_select %p52, 0, %s51
      %s54 = sadd.s32 1, %s45
      %s55 = scalar_select %p52, %s54, %s45
      %p56 = scmp.ge.s32.totalorder %s55, 1
      %s57 = scalar_select %p56, 0, %s55
      %s58 = sld [smem:[#allocation3 + %s46]]
      %s59 = sld [smem:[#allocation3 + %s53]]
      %s60 = ssub.s32 %s58, %s59
      %s61 = ssub.s32 %s45, %s57
      %s62 = sor.u32 %s60, %s61
      %p63 = scmp.eq.s32.totalorder %s62, 0
      %s65 = sadd.s32 %s64, 1
      %s66 = scalar_select %p63, %s64, %s65
      %p69 = pneg %p63
      %p70 = scmp.eq.s32.totalorder %s38, 4
      %p71 = por %p69, %p70
      %p72 = scmp.ne.s32.totalorder %s64, %s67
      %p73 = scmp.eq.s32.totalorder %s38, 0
      %p74 = por %p72, %p73
      %p75 = scmp.ne.s32.totalorder %s64, %s67
      %p76 = scmp.eq.s32.totalorder %s43, 4
      %p77 = por %p75, %p76
      %p78 = scmp.ne.s32.totalorder %s67, %s68
      %p79 = scmp.eq.s32.totalorder %s43, 0
      %p80 = por %p78, %p79
      %p81 = scmp.ne.s32.totalorder %s67, %s68
      %p82 = scmp.eq.s32.totalorder %s44, 4
      %p83 = por %p81, %p82
      %p85 = scmp.ne.s32.totalorder %s68, %s84
      %p86 = scmp.eq.s32.totalorder %s44, 0
      %p87 = por %p85, %p86
      %s88 = ssub.s32 %s46, %s53
      %s89 = ssub.s32 %s45, %s57
      %s90 = sor.u32 %s88, %s89
      %p91 = scmp.eq.s32.totalorder %s90, 0
      %s93 = sadd.s32 %s92, 1
      %s94 = scalar_select %p91, %s92, %s93
      %p97 = pneg %p91
      %p98 = scmp.eq.s32.totalorder %s38, 4
      %p99 = por %p97, %p98
      %p100 = scmp.ne.s32.totalorder %s92, %s95
      %p101 = scmp.eq.s32.totalorder %s38, 0
      %p102 = por %p100, %p101
      %p103 = scmp.ne.s32.totalorder %s92, %s95
      %p104 = scmp.eq.s32.totalorder %s43, 4
      %p105 = por %p103, %p104
      %p106 = scmp.ne.s32.totalorder %s95, %s96
      %p107 = scmp.eq.s32.totalorder %s43, 0
      %p108 = por %p106, %p107
      %p109 = scmp.ne.s32.totalorder %s95, %s96
      %p110 = scmp.eq.s32.totalorder %s44, 4
      %p111 = por %p109, %p110
      %p113 = scmp.ne.s32.totalorder %s96, %s112
      %p114 = scmp.eq.s32.totalorder %s44, 0
      %p115 = por %p113, %p114
      %p116 = scmp.le.s32.totalorder 1, %s38
      %p117 = scmp.lt.s32.totalorder %s38, 6
      %p118 = pnand %p116, %p117
      %p119 = pneg %p118
      // Predicated region
      $region9: #{tpu_custom_call.1} parent=5 // pred_check
        _
      $region10: #{tpu_custom_call.1} parent=5 // pred_check_branch
        %121 = sbr.rel (%p118) target = $region12
      $region11: #{tpu_custom_call.1} parent=5 // pred_region
        %s122 = ssub.s32 %s38, 1
      $region12: #{tpu_custom_call.1} parent=5 // pred_fallthru
        _
      %p123 = scmp.lt.s32.totalorder %s38, 5
      // Predicated region
      $region13: #{tpu_custom_call.1} parent=5 // pred_check
        %p124 = pneg %p123
      $region14: #{tpu_custom_call.1} parent=5 // pred_check_branch
        %126 = sbr.rel (%p124) target = $region16
      $region15: #{tpu_custom_call.1} parent=5 // pred_region
        // Predicated region
        $region17: #{tpu_custom_call.1} parent=15 // pred_check
          %p127 = pneg %p74
        $region18: #{tpu_custom_call.1} parent=15 // pred_check_branch
          %129 = sbr.rel (%p127) target = $region20
        $region19: #{tpu_custom_call.1} parent=15 // pred_region
          %s130 = sand.u32 %s64, 1
          %s131 = scalar_lea.sflag [#allocation9], %s130
          %s132 = sand.u32 %s64, 1
          %s133 = smul.addr %s132, 256
          %s134 = scalar_lea.vmem [#allocation8], %s133
          %s135 = sld [smem:[#allocation3 + %s46]]
          %s137 = ssub.s32 4096, 4096
          %138 = vsyncadd %s131, %s137
          %s139 = smul.addr %s135, 32
          %s140 = sadd.s32 %s45, %s139
          %s141 = smul.addr %s140, 128
          %s142 = scalar_lea.hbm %s5, %s141
          %s143 = sshll.u32 %s134, 4
          %s144 = int_to_ptr.vmem [resolvable:$true] %s143
          %149 = dma.hbm_to_vmem [thread:$0]  %s142, 4096, %s144, %s131, 128, 128, 8
        $region20: #{tpu_custom_call.1} parent=15 // pred_fallthru
          _
      $region16: #{tpu_custom_call.1} parent=5 // pred_fallthru
        _
      %p150 = scmp.le.s32.totalorder 1, %s38
      %p151 = scmp.lt.s32.totalorder %s38, 6
      %p152 = pnand %p150, %p151
      %p153 = pneg %p152
      // Predicated region
      $region21: #{tpu_custom_call.1} parent=5 // pred_check
        _
      $region22: #{tpu_custom_call.1} parent=5 // pred_check_branch
        %155 = sbr.rel (%p152) target = $region24
      $region23: #{tpu_custom_call.1} parent=5 // pred_region
        %s156 = ssub.s32 %s38, 1
        %s157 = sand.u32 %s67, 1
        %s158 = scalar_lea.sflag [#allocation9], %s157
        %s159 = sand.u32 %s67, 1
        %s160 = smul.addr %s159, 256
        %s161 = scalar_lea.vmem [#allocation8], %s160
        // Predicated region
        $region25: #{tpu_custom_call.1} parent=23 // pred_check
          %p162 = pneg %p80
        $region26: #{tpu_custom_call.1} parent=23 // pred_check_branch
          %164 = sbr.rel (%p162) target = $region28
        $region27: #{tpu_custom_call.1} parent=23 // pred_region
          %165 = dma.done %s158, 4096
        $region28: #{tpu_custom_call.1} parent=23 // pred_fallthru
          _
        %s166 = sand.u32 %s67, 1
        %s167 = scalar_lea.sflag [#allocation9], %s166
        %s168 = sand.u32 %s67, 1
        %s169 = smul.addr %s168, 256
        %s170 = scalar_lea.vmem [#allocation8], %s169
        %p171 = pneg %p80
        %p172 = pneg %p77
        %p173 = pneg %p108
        %p174 = pneg %p105
        %s175 = sand.u32 %s95, 1
        %s176 = scalar_lea.sflag [#allocation10], %s175
        %s177 = sand.u32 %s95, 1
        %s178 = smul.addr %s177, 4
        %s179 = scalar_lea.vmem [#allocation11], %s178
        %s180 = sld [smem:[#allocation3 + %s48]]
        %v181 = vld [vmem:[%s161] sm:$0xff]
        %v182 = vld [vmem:[%s161 + $0x8] sm:$0xff]
        %v183 = vld [vmem:[%s161 + $0x10] sm:$0xff]
        %v184 = vld [vmem:[%s161 + $0x18] sm:$0xff]
        %v185 = vld [vmem:[%s161 + $0x20] sm:$0xff]
        %v186 = vld [vmem:[%s161 + $0x28] sm:$0xff]
        %v187 = vld [vmem:[%s161 + $0x30] sm:$0xff]
        %v188 = vld [vmem:[%s161 + $0x38] sm:$0xff]
        %v189 = vld [vmem:[%s161 + $0x40] sm:$0xff]
        %v190 = vld [vmem:[%s161 + $0x48] sm:$0xff]
        %v191 = vld [vmem:[%s161 + $0x50] sm:$0xff]
        %v192 = vld [vmem:[%s161 + $0x58] sm:$0xff]
        %v193 = vld [vmem:[%s161 + $0x60] sm:$0xff]
        %v194 = vld [vmem:[%s161 + $0x68] sm:$0xff]
        %v195 = vld [vmem:[%s161 + $0x70] sm:$0xff]
        %v196 = vld [vmem:[%s161 + $0x78] sm:$0xff]
        %v197 = vld [vmem:[%s161 + $0x80] sm:$0xff]
        %v198 = vld [vmem:[%s161 + $0x88] sm:$0xff]
        %v199 = vld [vmem:[%s161 + $0x90] sm:$0xff]
        %v200 = vld [vmem:[%s161 + $0x98] sm:$0xff]
        %v201 = vld [vmem:[%s161 + $0xa0] sm:$0xff]
        %v202 = vld [vmem:[%s161 + $0xa8] sm:$0xff]
        %v203 = vld [vmem:[%s161 + $0xb0] sm:$0xff]
        %v204 = vld [vmem:[%s161 + $0xb8] sm:$0xff]
        %v205 = vld [vmem:[%s161 + $0xc0] sm:$0xff]
        %v206 = vld [vmem:[%s161 + $0xc8] sm:$0xff]
        %v207 = vld [vmem:[%s161 + $0xd0] sm:$0xff]
        %v208 = vld [vmem:[%s161 + $0xd8] sm:$0xff]
        %v209 = vld [vmem:[%s161 + $0xe0] sm:$0xff]
        %v210 = vld [vmem:[%s161 + $0xe8] sm:$0xff]
        %v211 = vld [vmem:[%s161 + $0xf0] sm:$0xff]
        %v212 = vld [vmem:[%s161 + $0xf8] sm:$0xff]
        %v213 = vlaneseq
        %v214 = vshrl.u32 %v213, 7
        %v215 = vadd.s32 %v214, 8
        %s216 = smul.u32 %s48, 2
        %s217 = sld [smem:[#allocation6 + %s216]]
        %s218 = sld [smem:[#allocation7 + %s216]]
        %v219 = vstv %s217
        %vm220 = vcmp.ge.s32.totalorder %v214, %v219
        %vm221 = vcmp.ge.s32.totalorder %v215, %v219
        %v222 = vstv %s218
        %vm223 = vcmp.lt.s32.totalorder %v214, %v222
        %vm224 = vcmp.lt.s32.totalorder %v215, %v222
        %vm225 = vmand %vm220, %vm223
        %vm226 = vmand %vm221, %vm224
        %v227 = vsel %vm225, 1, 0
        %v228 = vsel %vm226, 1, 0
        %vm229 = vcmp.eq.s32.totalorder %v227, 1
        %vm230 = vcmp.eq.s32.totalorder %v228, 1
        %v231 = vsel %vm229, %v181, -inf
        %v232 = vsel %vm230, %v182, -inf
        %v233 = vsel %vm229, %v183, -inf
        %v234 = vsel %vm230, %v184, -inf
        %v235 = vsel %vm229, %v185, -inf
        %v236 = vsel %vm230, %v186, -inf
        %v237 = vsel %vm229, %v187, -inf
        %v238 = vsel %vm230, %v188, -inf
        %v239 = vsel %vm229, %v189, -inf
        %v240 = vsel %vm230, %v190, -inf
        %v241 = vsel %vm229, %v191, -inf
        %v242 = vsel %vm230, %v192, -inf
        %v243 = vsel %vm229, %v193, -inf
        %v244 = vsel %vm230, %v194, -inf
        %v245 = vsel %vm229, %v195, -inf
        %v246 = vsel %vm230, %v196, -inf
        %v247 = vsel %vm229, %v197, -inf
        %v248 = vsel %vm230, %v198, -inf
        %v249 = vsel %vm229, %v199, -inf
        %v250 = vsel %vm230, %v200, -inf
        %v251 = vsel %vm229, %v201, -inf
        %v252 = vsel %vm230, %v202, -inf
        %v253 = vsel %vm229, %v203, -inf
        %v254 = vsel %vm230, %v204, -inf
        %v255 = vsel %vm229, %v205, -inf
        %v256 = vsel %vm230, %v206, -inf
        %v257 = vsel %vm229, %v207, -inf
        %v258 = vsel %vm230, %v208, -inf
        %v259 = vsel %vm229, %v209, -inf
        %v260 = vsel %vm230, %v210, -inf
        %v261 = vsel %vm229, %v211, -inf
        %v262 = vsel %vm230, %v212, -inf
        %vm263 = vcmask 261120
        %v264 = vsel %vm263, %v231, -inf
        %v265 = vsel %vm263, %v232, -inf
        %v266 = vmax.f32 %v264, %v265
        %v267 = vrot.slane %v266, 4
        %v268 = vmax.f32 %v266, %v267
        %v269 = vrot.slane %v268, 2
        %v270 = vmax.f32 %v268, %v269
        %v271 = vrot.slane %v270, 1
        %v272 = vmax.f32 %v270, %v271
        %v273 = vsel %vm263, %v233, -inf
        %v274 = vsel %vm263, %v234, -inf
        %v275 = vmax.f32 %v273, %v274
        %v276 = vrot.slane %v275, 4
        %v277 = vmax.f32 %v275, %v276
        %v278 = vrot.slane %v277, 2
        %v279 = vmax.f32 %v277, %v278
        %v280 = vrot.slane %v279, 1
        %v281 = vmax.f32 %v279, %v280
        %v282 = vsel %vm263, %v235, -inf
        %v283 = vsel %vm263, %v236, -inf
        %v284 = vmax.f32 %v282, %v283
        %v285 = vrot.slane %v284, 4
        %v286 = vmax.f32 %v284, %v285
        %v287 = vrot.slane %v286, 2
        %v288 = vmax.f32 %v286, %v287
        %v289 = vrot.slane %v288, 1
        %v290 = vmax.f32 %v288, %v289
        %v291 = vsel %vm263, %v237, -inf
        %v292 = vsel %vm263, %v238, -inf
        %v293 = vmax.f32 %v291, %v292
        %v294 = vrot.slane %v293, 4
        %v295 = vmax.f32 %v293, %v294
        %v296 = vrot.slane %v295, 2
        %v297 = vmax.f32 %v295, %v296
        %v298 = vrot.slane %v297, 1
        %v299 = vmax.f32 %v297, %v298
        %v300 = vsel %vm263, %v239, -inf
        %v301 = vsel %vm263, %v240, -inf
        %v302 = vmax.f32 %v300, %v301
        %v303 = vrot.slane %v302, 4
        %v304 = vmax.f32 %v302, %v303
        %v305 = vrot.slane %v304, 2
        %v306 = vmax.f32 %v304, %v305
        %v307 = vrot.slane %v306, 1
        %v308 = vmax.f32 %v306, %v307
        %v309 = vsel %vm263, %v241, -inf
        %v310 = vsel %vm263, %v242, -inf
        %v311 = vmax.f32 %v309, %v310
        %v312 = vrot.slane %v311, 4
        %v313 = vmax.f32 %v311, %v312
        %v314 = vrot.slane %v313, 2
        %v315 = vmax.f32 %v313, %v314
        %v316 = vrot.slane %v315, 1
        %v317 = vmax.f32 %v315, %v316
        %v318 = vsel %vm263, %v243, -inf
        %v319 = vsel %vm263, %v244, -inf
        %v320 = vmax.f32 %v318, %v319
        %v321 = vrot.slane %v320, 4
        %v322 = vmax.f32 %v320, %v321
        %v323 = vrot.slane %v322, 2
        %v324 = vmax.f32 %v322, %v323
        %v325 = vrot.slane %v324, 1
        %v326 = vmax.f32 %v324, %v325
        %v327 = vsel %vm263, %v245, -inf
        %v328 = vsel %vm263, %v246, -inf
        %v329 = vmax.f32 %v327, %v328
        %v330 = vrot.slane %v329, 4
        %v331 = vmax.f32 %v329, %v330
        %v332 = vrot.slane %v331, 2
        %v333 = vmax.f32 %v331, %v332
        %v334 = vrot.slane %v333, 1
        %v335 = vmax.f32 %v333, %v334
        %v336 = vsel %vm263, %v247, -inf
        %v337 = vsel %vm263, %v248, -inf
        %v338 = vmax.f32 %v336, %v337
        %v339 = vrot.slane %v338, 4
        %v340 = vmax.f32 %v338, %v339
        %v341 = vrot.slane %v340, 2
        %v342 = vmax.f32 %v340, %v341
        %v343 = vrot.slane %v342, 1
        %v344 = vmax.f32 %v342, %v343
        %v345 = vsel %vm263, %v249, -inf
        %v346 = vsel %vm263, %v250, -inf
        %v347 = vmax.f32 %v345, %v346
        %v348 = vrot.slane %v347, 4
        %v349 = vmax.f32 %v347, %v348
        %v350 = vrot.slane %v349, 2
        %v351 = vmax.f32 %v349, %v350
        %v352 = vrot.slane %v351, 1
        %v353 = vmax.f32 %v351, %v352
        %v354 = vsel %vm263, %v251, -inf
        %v355 = vsel %vm263, %v252, -inf
        %v356 = vmax.f32 %v354, %v355
        %v357 = vrot.slane %v356, 4
        %v358 = vmax.f32 %v356, %v357
        %v359 = vrot.slane %v358, 2
        %v360 = vmax.f32 %v358, %v359
        %v361 = vrot.slane %v360, 1
        %v362 = vmax.f32 %v360, %v361
        %v363 = vsel %vm263, %v253, -inf
        %v364 = vsel %vm263, %v254, -inf
        %v365 = vmax.f32 %v363, %v364
        %v366 = vrot.slane %v365, 4
        %v367 = vmax.f32 %v365, %v366
        %v368 = vrot.slane %v367, 2
        %v369 = vmax.f32 %v367, %v368
        %v370 = vrot.slane %v369, 1
        %v371 = vmax.f32 %v369, %v370
        %v372 = vsel %vm263, %v255, -inf
        %v373 = vsel %vm263, %v256, -inf
        %v374 = vmax.f32 %v372, %v373
        %v375 = vrot.slane %v374, 4
        %v376 = vmax.f32 %v374, %v375
        %v377 = vrot.slane %v376, 2
        %v378 = vmax.f32 %v376, %v377
        %v379 = vrot.slane %v378, 1
        %v380 = vmax.f32 %v378, %v379
        %v381 = vsel %vm263, %v257, -inf
        %v382 = vsel %vm263, %v258, -inf
        %v383 = vmax.f32 %v381, %v382
        %v384 = vrot.slane %v383, 4
        %v385 = vmax.f32 %v383, %v384
        %v386 = vrot.slane %v385, 2
        %v387 = vmax.f32 %v385, %v386
        %v388 = vrot.slane %v387, 1
        %v389 = vmax.f32 %v387, %v388
        %v390 = vsel %vm263, %v259, -inf
        %v391 = vsel %vm263, %v260, -inf
        %v392 = vmax.f32 %v390, %v391
        %v393 = vrot.slane %v392, 4
        %v394 = vmax.f32 %v392, %v393
        %v395 = vrot.slane %v394, 2
        %v396 = vmax.f32 %v394, %v395
        %v397 = vrot.slane %v396, 1
        %v398 = vmax.f32 %v396, %v397
        %v399 = vsel %vm263, %v261, -inf
        %v400 = vsel %vm263, %v262, -inf
        %v401 = vmax.f32 %v399, %v400
        %v402 = vrot.slane %v401, 4
        %v403 = vmax.f32 %v401, %v402
        %v404 = vrot.slane %v403, 2
        %v405 = vmax.f32 %v403, %v404
        %v406 = vrot.slane %v405, 1
        %v407 = vmax.f32 %v405, %v406
        %s408 = sadd.s32 %s216, 1
        %s409 = sld [smem:[#allocation6 + %s408]]
        %s410 = sld [smem:[#allocation7 + %s408]]
        %v411 = vstv %s409
        %vm412 = vcmp.ge.s32.totalorder %v214, %v411
        %vm413 = vcmp.ge.s32.totalorder %v215, %v411
        %v414 = vstv %s410
        %vm415 = vcmp.lt.s32.totalorder %v214, %v414
        %vm416 = vcmp.lt.s32.totalorder %v215, %v414
        %vm417 = vmand %vm412, %vm415
        %vm418 = vmand %vm413, %vm416
        %v419 = vsel %vm417, 1, 0
        %v420 = vsel %vm418, 1, 0
        %vm421 = vcmp.eq.s32.totalorder %v419, 1
        %vm422 = vcmp.eq.s32.totalorder %v420, 1
        %v423 = vsel %vm421, %v181, -inf
        %v424 = vsel %vm422, %v182, -inf
        %v425 = vsel %vm421, %v183, -inf
        %v426 = vsel %vm422, %v184, -inf
        %v427 = vsel %vm421, %v185, -inf
        %v428 = vsel %vm422, %v186, -inf
        %v429 = vsel %vm421, %v187, -inf
        %v430 = vsel %vm422, %v188, -inf
        %v431 = vsel %vm421, %v189, -inf
        %v432 = vsel %vm422, %v190, -inf
        %v433 = vsel %vm421, %v191, -inf
        %v434 = vsel %vm422, %v192, -inf
        %v435 = vsel %vm421, %v193, -inf
        %v436 = vsel %vm422, %v194, -inf
        %v437 = vsel %vm421, %v195, -inf
        %v438 = vsel %vm422, %v196, -inf
        %v439 = vsel %vm421, %v197, -inf
        %v440 = vsel %vm422, %v198, -inf
        %v441 = vsel %vm421, %v199, -inf
        %v442 = vsel %vm422, %v200, -inf
        %v443 = vsel %vm421, %v201, -inf
        %v444 = vsel %vm422, %v202, -inf
        %v445 = vsel %vm421, %v203, -inf
        %v446 = vsel %vm422, %v204, -inf
        %v447 = vsel %vm421, %v205, -inf
        %v448 = vsel %vm422, %v206, -inf
        %v449 = vsel %vm421, %v207, -inf
        %v450 = vsel %vm422, %v208, -inf
        %v451 = vsel %vm421, %v209, -inf
        %v452 = vsel %vm422, %v210, -inf
        %v453 = vsel %vm421, %v211, -inf
        %v454 = vsel %vm422, %v212, -inf
        %v455 = vsel %vm263, %v423, -inf
        %v456 = vsel %vm263, %v424, -inf
        %v457 = vmax.f32 %v455, %v456
        %v458 = vrot.slane %v457, 4
        %v459 = vmax.f32 %v457, %v458
        %v460 = vrot.slane %v459, 2
        %v461 = vmax.f32 %v459, %v460
        %v462 = vrot.slane %v461, 1
        %v463 = vmax.f32 %v461, %v462
        %v464 = vsel %vm263, %v425, -inf
        %v465 = vsel %vm263, %v426, -inf
        %v466 = vmax.f32 %v464, %v465
        %v467 = vrot.slane %v466, 4
        %v468 = vmax.f32 %v466, %v467
        %v469 = vrot.slane %v468, 2
        %v470 = vmax.f32 %v468, %v469
        %v471 = vrot.slane %v470, 1
        %v472 = vmax.f32 %v470, %v471
        %v473 = vsel %vm263, %v427, -inf
        %v474 = vsel %vm263, %v428, -inf
        %v475 = vmax.f32 %v473, %v474
        %v476 = vrot.slane %v475, 4
        %v477 = vmax.f32 %v475, %v476
        %v478 = vrot.slane %v477, 2
        %v479 = vmax.f32 %v477, %v478
        %v480 = vrot.slane %v479, 1
        %v481 = vmax.f32 %v479, %v480
        %v482 = vsel %vm263, %v429, -inf
        %v483 = vsel %vm263, %v430, -inf
        %v484 = vmax.f32 %v482, %v483
        %v485 = vrot.slane %v484, 4
        %v486 = vmax.f32 %v484, %v485
        %v487 = vrot.slane %v486, 2
        %v488 = vmax.f32 %v486, %v487
        %v489 = vrot.slane %v488, 1
        %v490 = vmax.f32 %v488, %v489
        %v491 = vsel %vm263, %v431, -inf
        %v492 = vsel %vm263, %v432, -inf
        %v493 = vmax.f32 %v491, %v492
        %v494 = vrot.slane %v493, 4
        %v495 = vmax.f32 %v493, %v494
        %v496 = vrot.slane %v495, 2
        %v497 = vmax.f32 %v495, %v496
        %v498 = vrot.slane %v497, 1
        %v499 = vmax.f32 %v497, %v498
        %v500 = vsel %vm263, %v433, -inf
        %v501 = vsel %vm263, %v434, -inf
        %v502 = vmax.f32 %v500, %v501
        %v503 = vrot.slane %v502, 4
        %v504 = vmax.f32 %v502, %v503
        %v505 = vrot.slane %v504, 2
        %v506 = vmax.f32 %v504, %v505
        %v507 = vrot.slane %v506, 1
        %v508 = vmax.f32 %v506, %v507
        %v509 = vsel %vm263, %v435, -inf
        %v510 = vsel %vm263, %v436, -inf
        %v511 = vmax.f32 %v509, %v510
        %v512 = vrot.slane %v511, 4
        %v513 = vmax.f32 %v511, %v512
        %v514 = vrot.slane %v513, 2
        %v515 = vmax.f32 %v513, %v514
        %v516 = vrot.slane %v515, 1
        %v517 = vmax.f32 %v515, %v516
        %v518 = vsel %vm263, %v437, -inf
        %v519 = vsel %vm263, %v438, -inf
        %v520 = vmax.f32 %v518, %v519
        %v521 = vrot.slane %v520, 4
        %v522 = vmax.f32 %v520, %v521
        %v523 = vrot.slane %v522, 2
        %v524 = vmax.f32 %v522, %v523
        %v525 = vrot.slane %v524, 1
        %v526 = vmax.f32 %v524, %v525
        %v527 = vsel %vm263, %v439, -inf
        %v528 = vsel %vm263, %v440, -inf
        %v529 = vmax.f32 %v527, %v528
        %v530 = vrot.slane %v529, 4
        %v531 = vmax.f32 %v529, %v530
        %v532 = vrot.slane %v531, 2
        %v533 = vmax.f32 %v531, %v532
        %v534 = vrot.slane %v533, 1
        %v535 = vmax.f32 %v533, %v534
        %v536 = vsel %vm263, %v441, -inf
        %v537 = vsel %vm263, %v442, -inf
        %v538 = vmax.f32 %v536, %v537
        %v539 = vrot.slane %v538, 4
        %v540 = vmax.f32 %v538, %v539
        %v541 = vrot.slane %v540, 2
        %v542 = vmax.f32 %v540, %v541
        %v543 = vrot.slane %v542, 1
        %v544 = vmax.f32 %v542, %v543
        %v545 = vsel %vm263, %v443, -inf
        %v546 = vsel %vm263, %v444, -inf
        %v547 = vmax.f32 %v545, %v546
        %v548 = vrot.slane %v547, 4
        %v549 = vmax.f32 %v547, %v548
        %v550 = vrot.slane %v549, 2
        %v551 = vmax.f32 %v549, %v550
        %v552 = vrot.slane %v551, 1
        %v553 = vmax.f32 %v551, %v552
        %v554 = vsel %vm263, %v445, -inf
        %v555 = vsel %vm263, %v446, -inf
        %v556 = vmax.f32 %v554, %v555
        %v557 = vrot.slane %v556, 4
        %v558 = vmax.f32 %v556, %v557
        %v559 = vrot.slane %v558, 2
        %v560 = vmax.f32 %v558, %v559
        %v561 = vrot.slane %v560, 1
        %v562 = vmax.f32 %v560, %v561
        %v563 = vsel %vm263, %v447, -inf
        %v564 = vsel %vm263, %v448, -inf
        %v565 = vmax.f32 %v563, %v564
        %v566 = vrot.slane %v565, 4
        %v567 = vmax.f32 %v565, %v566
        %v568 = vrot.slane %v567, 2
        %v569 = vmax.f32 %v567, %v568
        %v570 = vrot.slane %v569, 1
        %v571 = vmax.f32 %v569, %v570
        %v572 = vsel %vm263, %v449, -inf
        %v573 = vsel %vm263, %v450, -inf
        %v574 = vmax.f32 %v572, %v573
        %v575 = vrot.slane %v574, 4
        %v576 = vmax.f32 %v574, %v575
        %v577 = vrot.slane %v576, 2
        %v578 = vmax.f32 %v576, %v577
        %v579 = vrot.slane %v578, 1
        %v580 = vmax.f32 %v578, %v579
        %v581 = vsel %vm263, %v451, -inf
        %v582 = vsel %vm263, %v452, -inf
        %v583 = vmax.f32 %v581, %v582
        %v584 = vrot.slane %v583, 4
        %v585 = vmax.f32 %v583, %v584
        %v586 = vrot.slane %v585, 2
        %v587 = vmax.f32 %v585, %v586
        %v588 = vrot.slane %v587, 1
        %v589 = vmax.f32 %v587, %v588
        %v590 = vsel %vm263, %v453, -inf
        %v591 = vsel %vm263, %v454, -inf
        %v592 = vmax.f32 %v590, %v591
        %v593 = vrot.slane %v592, 4
        %v594 = vmax.f32 %v592, %v593
        %v595 = vrot.slane %v594, 2
        %v596 = vmax.f32 %v594, %v595
        %v597 = vrot.slane %v596, 1
        %v598 = vmax.f32 %v596, %v597
        %s599 = sld [smem:[#allocation4 + %s216]]
        %s600 = sld [smem:[#allocation5 + %s216]]
        %v601 = vstv %s599
        %vm602 = vcmp.ge.s32.totalorder %v214, %v601
        %vm603 = vcmp.ge.s32.totalorder %v215, %v601
        %v604 = vstv %s600
        %vm605 = vcmp.lt.s32.totalorder %v214, %v604
        %vm606 = vcmp.lt.s32.totalorder %v215, %v604
        %vm607 = vmand %vm602, %vm605
        %vm608 = vmand %vm603, %vm606
        %p609 = scmp.le.s32.totalorder %s600, %s599
        %p610 = scmp.le.s32.totalorder %s218, %s217
        %p611 = por %p609, %p610
        %v612 = vsel %vm607, 1, 0
        %v613 = vsel %vm608, 1, 0
        %vm614 = vcmp.eq.s32.totalorder %v612, 1
        %vm615 = vcmp.eq.s32.totalorder %v613, 1
        %vm632 = vcmask 1041409
        %v633 = vsel %vm632, %v281, %v272
        %vm634 = vcmask 1042434
        %v635 = vsel %vm634, %v290, %v633
        %vm636 = vcmask 1043459
        %v637 = vsel %vm636, %v299, %v635
        %vm638 = vcmask 1044484
        %v639 = vsel %vm638, %v308, %v637
        %vm640 = vcmask 1045509
        %v641 = vsel %vm640, %v317, %v639
        %vm642 = vcmask 1046534
        %v643 = vsel %vm642, %v326, %v641
        %vm644 = vcmask 1047559
        %v645 = vsel %vm644, %v335, %v643
        %v646 = vsel %vm632, %v353, %v344
        %v647 = vsel %vm634, %v362, %v646
        %v648 = vsel %vm636, %v371, %v647
        %v649 = vsel %vm638, %v380, %v648
        %v650 = vsel %vm640, %v389, %v649
        %v651 = vsel %vm642, %v398, %v650
        %v652 = vsel %vm644, %v407, %v651
        %v655 = vsel %vm614, %v645, -inf
        %v656 = vsel %vm615, %v652, -inf
        %v657 = vsel %vm263, %v655, -inf
        %v658 = vsel %vm263, %v656, -inf
        %v659 = vmax.f32 %v657, %v658
        %v660 = vrot.slane %v659, 4
        %v661 = vmax.f32 %v659, %v660
        %v662 = vrot.slane %v661, 2
        %v663 = vmax.f32 %v661, %v662
        %v664 = vrot.slane %v663, 1
        %v665 = vmax.f32 %v663, %v664
        %s666 = scalar_select %p611, 1, 0
        %v667 = vstv %s666
        %vm668 = vcmp.eq.s32.totalorder %v667, 1
        %v669 = vsel %vm668, 0.0, %v665
        %p670 = scmp.le.s32.totalorder %s410, %s409
        %p671 = por %p609, %p670
        %v688 = vsel %vm632, %v472, %v463
        %v689 = vsel %vm634, %v481, %v688
        %v690 = vsel %vm636, %v490, %v689
        %v691 = vsel %vm638, %v499, %v690
        %v692 = vsel %vm640, %v508, %v691
        %v693 = vsel %vm642, %v517, %v692
        %v694 = vsel %vm644, %v526, %v693
        %v695 = vsel %vm632, %v544, %v535
        %v696 = vsel %vm634, %v553, %v695
        %v697 = vsel %vm636, %v562, %v696
        %v698 = vsel %vm638, %v571, %v697
        %v699 = vsel %vm640, %v580, %v698
        %v700 = vsel %vm642, %v589, %v699
        %v701 = vsel %vm644, %v598, %v700
        %v704 = vsel %vm614, %v694, -inf
        %v705 = vsel %vm615, %v701, -inf
        %v706 = vsel %vm263, %v704, -inf
        %v707 = vsel %vm263, %v705, -inf
        %v708 = vmax.f32 %v706, %v707
        %v709 = vrot.slane %v708, 4
        %v710 = vmax.f32 %v708, %v709
        %v711 = vrot.slane %v710, 2
        %v712 = vmax.f32 %v710, %v711
        %v713 = vrot.slane %v712, 1
        %v714 = vmax.f32 %v712, %v713
        %s715 = scalar_select %p671, 1, 0
        %v716 = vstv %s715
        %vm717 = vcmp.eq.s32.totalorder %v716, 1
        %v718 = vsel %vm717, 0.0, %v714
        %s719 = sld [smem:[#allocation4 + %s408]]
        %s720 = sld [smem:[#allocation5 + %s408]]
        %v721 = vstv %s719
        %vm722 = vcmp.ge.s32.totalorder %v214, %v721
        %vm723 = vcmp.ge.s32.totalorder %v215, %v721
        %v724 = vstv %s720
        %vm725 = vcmp.lt.s32.totalorder %v214, %v724
        %vm726 = vcmp.lt.s32.totalorder %v215, %v724
        %vm727 = vmand %vm722, %vm725
        %vm728 = vmand %vm723, %vm726
        %p729 = scmp.le.s32.totalorder %s720, %s719
        %p730 = por %p729, %p610
        %v731 = vsel %vm727, 1, 0
        %v732 = vsel %vm728, 1, 0
        %vm733 = vcmp.eq.s32.totalorder %v731, 1
        %vm734 = vcmp.eq.s32.totalorder %v732, 1
        %v735 = vsel %vm733, %v645, -inf
        %v736 = vsel %vm734, %v652, -inf
        %v737 = vsel %vm263, %v735, -inf
        %v738 = vsel %vm263, %v736, -inf
        %v739 = vmax.f32 %v737, %v738
        %v740 = vrot.slane %v739, 4
        %v741 = vmax.f32 %v739, %v740
        %v742 = vrot.slane %v741, 2
        %v743 = vmax.f32 %v741, %v742
        %v744 = vrot.slane %v743, 1
        %v745 = vmax.f32 %v743, %v744
        %s746 = scalar_select %p730, 1, 0
        %v747 = vstv %s746
        %vm748 = vcmp.eq.s32.totalorder %v747, 1
        %v749 = vsel %vm748, 0.0, %v745
        %p750 = por %p729, %p670
        %v751 = vsel %vm733, %v694, -inf
        %v752 = vsel %vm734, %v701, -inf
        %v753 = vsel %vm263, %v751, -inf
        %v754 = vsel %vm263, %v752, -inf
        %v755 = vmax.f32 %v753, %v754
        %v756 = vrot.slane %v755, 4
        %v757 = vmax.f32 %v755, %v756
        %v758 = vrot.slane %v757, 2
        %v759 = vmax.f32 %v757, %v758
        %v760 = vrot.slane %v759, 1
        %v761 = vmax.f32 %v759, %v760
        %s762 = scalar_select %p750, 1, 0
        %v763 = vstv %s762
        %vm764 = vcmp.eq.s32.totalorder %v763, 1
        %v765 = vsel %vm764, 0.0, %v761
        %vm766 = vcmask 1040384
        %v767 = vsel %vm766, %v669, %v718
        %vm768 = vcmask 1041408
        %v769 = vsel %vm768, %v767, %v749
        %vm770 = vcmask 1042432
        %v771 = vsel %vm770, %v769, %v765
        %vm772 = vcmask 257024
        %773 = vst.msk [vmem:[%s179] sm:$0xf] %vm772, %v771
        %s774 = sand.u32 %s95, 1
        %s775 = scalar_lea.sflag [#allocation10], %s774
        %s776 = sand.u32 %s95, 1
        %s777 = smul.addr %s776, 4
        %s778 = scalar_lea.vmem [#allocation11], %s777
        // Predicated region
        $region29: #{tpu_custom_call.1} parent=23 // pred_check
          %p779 = pneg %p105
        $region30: #{tpu_custom_call.1} parent=23 // pred_check_branch
          %781 = sbr.rel (%p779) target = $region32
        $region31: #{tpu_custom_call.1} parent=23 // pred_region
          %s783 = ssub.s32 64, 64
          %784 = vsyncadd %s775, %s783
          %s785 = sadd.s32 %s47, %s48
          %s786 = smul.addr %s785, 64
          %s787 = scalar_lea.hbm %s6, %s786
          %s789 = sshll.u32 %s778, 4
          %s790 = int_to_ptr.vmem [resolvable:$true] %s789
          %792 = dma.vmem_to_hbm [thread:$0]  %s790, 64, %s787, %s775
        $region32: #{tpu_custom_call.1} parent=23 // pred_fallthru
          _
      $region24: #{tpu_custom_call.1} parent=5 // pred_fallthru
        _
      %p793 = scmp.le.s32.totalorder 2, %s38
      // Predicated region
      $region33: #{tpu_custom_call.1} parent=5 // pred_check
        %p794 = pneg %p793
      $region34: #{tpu_custom_call.1} parent=5 // pred_check_branch
        %796 = sbr.rel (%p794) target = $region36
      $region35: #{tpu_custom_call.1} parent=5 // pred_region
        %s797 = ssub.s32 %s38, 2
        // Predicated region
        $region37: #{tpu_custom_call.1} parent=35 // pred_check
          %p798 = pneg %p111
        $region38: #{tpu_custom_call.1} parent=35 // pred_check_branch
          %800 = sbr.rel (%p798) target = $region40
        $region39: #{tpu_custom_call.1} parent=35 // pred_region
          %s801 = sand.u32 %s96, 1
          %s802 = scalar_lea.sflag [#allocation10], %s801
          %s803 = sand.u32 %s96, 1
          %s804 = smul.addr %s803, 4
          %s805 = scalar_lea.vmem [#allocation11], %s804
          %806 = dma.done %s802, 64
        $region40: #{tpu_custom_call.1} parent=35 // pred_fallthru
          _
      $region36: #{tpu_custom_call.1} parent=5 // pred_fallthru
        _
    $region6: #{tpu_custom_call.1} parent=1 // loop_footer
      %s42 = sadd.s32 1, %s38
    $region7: #{tpu_custom_call.1} parent=1 // loop_footer_branch
      %37 = sbr.rel target = $region3
    $region8: #{tpu_custom_call.1} parent=1 // loop_exit
      _
    %807 = vsyncpa [#allocation9], 1
    %s808 = scalar_lea.sflag [#allocation9], 1
    %809 = vsyncpa %s808, 1
    %810 = vsyncpa [#allocation10], 1
    %s811 = scalar_lea.sflag [#allocation10], 1
    %812 = vsyncpa %s811, 1

</llo_original>
